<compile_context>
chip_gen: v5e
topology: v5e:2x2
jax: 0.10.0
libtpu: 0.0.40
codegen_flags: <defaults>
</compile_context>

<pallas_src>
import jax
import jax.numpy as jnp
from jax.experimental import pallas as pl
from jax.experimental.pallas import tpu as pltpu


def _make_channel_attention_kernel(hw_total, t_hw, needs_mask):
    rem = hw_total % t_hw  # valid lanes in the (partial) last spatial tile

    def _accumulate(xs, sum_acc, max_acc):
        # Sum accumulates in f32; max reduces in native dtype and only the
        # small (TB, C) partial is cast to f32.
        sum_acc[...] += jnp.sum(xs, axis=-1, dtype=jnp.float32)
        max_acc[...] = jnp.maximum(
            max_acc[...], jnp.max(xs, axis=-1).astype(jnp.float32))

    def kernel(x_ref, w1_ref, w2_ref, o_ref, sum_acc, max_acc):
        # x_ref : (TB, C, t_hw) spatial tile of x viewed as (B, C, H*W)
        # w1_ref: (C, Cr)   == Conv2d(C, Cr, 1, bias=False).weight squeezed + T
        # w2_ref: (Cr, C)   == Conv2d(Cr, C, 1, bias=False).weight squeezed + T
        # o_ref : (TB, 1, C) sigmoid(MLP(avgpool) + MLP(maxpool))
        k = pl.program_id(1)
        last = pl.num_programs(1) - 1

        @pl.when(k == 0)
        def _init():
            sum_acc[...] = jnp.zeros(sum_acc.shape, sum_acc.dtype)
            max_acc[...] = jnp.full(max_acc.shape, -jnp.inf, max_acc.dtype)

        if needs_mask:
            # Steady state: unmasked accumulate (pure VPU add/max that stays
            # hidden under the HBM DMA).  Each k runs exactly one branch.
            @pl.when(k < last)
            def _steady():
                _accumulate(x_ref[...], sum_acc, max_acc)

            # Only the last (partial) tile pays for the mask; lanes are
            # compared against the compile-time constant `rem`.
            @pl.when(k == last)
            def _tail():
                xs = x_ref[...]
                lane = jax.lax.broadcasted_iota(jnp.int32, xs.shape, 2)
                valid = lane < rem
                x_sum = jnp.where(valid, xs, jnp.zeros_like(xs))
                x_max = jnp.where(valid, xs, jnp.full_like(xs, -jnp.inf))
                sum_acc[...] += jnp.sum(x_sum, axis=-1, dtype=jnp.float32)
                max_acc[...] = jnp.maximum(
                    max_acc[...],
                    jnp.max(x_max, axis=-1).astype(jnp.float32))
        else:
            # t_hw divides HW exactly, or t_hw == HW (full-extent lane block:
            # Mosaic masks the pad lanes of full-extent blocks in reductions).
            _accumulate(x_ref[...], sum_acc, max_acc)

        @pl.when(k == last)
        def _finalize():
            avg = sum_acc[...] * (1.0 / float(hw_total))   # (TB, C) f32
            mx = max_acc[...]                              # (TB, C) f32
            # No explicit upcast: jnp.dot consumes bf16/f32 weights natively
            # and accumulates in f32 via preferred_element_type.
            w1 = w1_ref[...]                               # (C, Cr)
            w2 = w2_ref[...]                               # (Cr, C)

            def shared_mlp(p):
                h = jnp.dot(p, w1, preferred_element_type=jnp.float32)
                h = jnp.maximum(h, 0.0)                    # ReLU
                return jnp.dot(h, w2, preferred_element_type=jnp.float32)

            out = jax.nn.sigmoid(shared_mlp(avg) + shared_mlp(mx))  # (TB, C)
            o_ref[...] = out.reshape(o_ref.shape).astype(o_ref.dtype)

    return kernel


def _choose_tiling(B, C, HW, itemsize, target_block_bytes):
    """Pick (tb, t_hw): a batch tile (divisor of B) and a lane-multiple spatial
    tile.  Preference order:
      1. keep grid_b = B // tb >= 2 so 2-TC parts (v7x) can split the batch,
      2. shrink tb before letting t_hw fall below ~512 lanes (long contiguous
         per-row DMAs, block stays within budget even for large C),
      3. within the above, take the largest batch tile that fits the budget.
    """
    min_lanes = HW if HW <= 512 else 512
    divisors = sorted((d for d in range(1, B + 1) if B % d == 0), reverse=True)

    def fits(tb):
        return tb * C * min_lanes * itemsize <= target_block_bytes

    preferred = [d for d in divisors if (B < 2 or B // d >= 2) and fits(d)]
    fallback = [d for d in divisors if fits(d)]
    tb = (preferred or fallback or [1])[0]

    row_bytes = tb * C * itemsize
    if HW * row_bytes <= target_block_bytes:
        t_hw = HW                       # whole spatial extent in one block
    else:
        t_hw = max(128, (target_block_bytes // row_bytes) // 128 * 128)
        t_hw = min(t_hw, HW)
    return tb, t_hw


def channel_attention(x, w1, w2, *, target_block_bytes=8 * 1024 * 1024):
    """x: (B, C, H, W) NCHW; w1: (Cr, C, 1, 1); w2: (C, Cr, 1, 1).
    Returns sigmoid(MLP(avgpool(x)) + MLP(maxpool(x))) with shape (B, C, 1, 1),
    matching the PyTorch ChannelAttentionModule forward."""
    B, C, H, W = x.shape
    Cr = w1.shape[0]
    HW = H * W
    assert jnp.issubdtype(x.dtype, jnp.floating), (
        "channel_attention expects a floating-point input (-inf max init)")

    x_flat = x.reshape(B, C, HW)
    w1_t = w1.reshape(Cr, C).T          # (C, Cr)
    w2_t = w2.reshape(C, Cr).T          # (Cr, C)

    itemsize = jnp.dtype(x.dtype).itemsize
    tb, t_hw = _choose_tiling(B, C, HW, itemsize, target_block_bytes)
    grid_b = B // tb
    grid_k = pl.cdiv(HW, t_hw)
    needs_mask = (t_hw != HW) and (HW % t_hw != 0)

    kernel = _make_channel_attention_kernel(HW, t_hw, needs_mask)

    # Explicit scoped-VMEM budget: 2x double-buffered x blocks + weight blocks
    # + output + f32 accumulators + headroom.
    w_itemsize = max(jnp.dtype(w1.dtype).itemsize, jnp.dtype(w2.dtype).itemsize)
    x_block_bytes = tb * C * t_hw * itemsize
    need = (2 * x_block_bytes
            + 2 * 2 * C * Cr * w_itemsize
            + 2 * tb * C * itemsize
            + 2 * tb * C * 4)
    vmem_limit = min(128 << 20, max(32 << 20, int(need + (4 << 20))))

    out = pl.pallas_call(
        kernel,
        out_shape=jax.ShapeDtypeStruct((B, 1, C), x.dtype),
        grid_spec=pltpu.PrefetchScalarGridSpec(
            num_scalar_prefetch=0,
            grid=(grid_b, grid_k),
            in_specs=[
                pl.BlockSpec((tb, C, t_hw), lambda b, k: (b, 0, k)),
                pl.BlockSpec((C, Cr), lambda b, k: (0, 0)),
                pl.BlockSpec((Cr, C), lambda b, k: (0, 0)),
            ],
            out_specs=pl.BlockSpec((tb, 1, C), lambda b, k: (b, 0, 0)),
            scratch_shapes=[
                pltpu.VMEM((tb, C), jnp.float32),   # running spatial sum
                pltpu.VMEM((tb, C), jnp.float32),   # running spatial max
            ],
        ),
        compiler_params=pltpu.CompilerParams(
            # TODO(synk): evaluate pltpu.CORE_PARALLEL on the batch axis for
            # v7x; "parallel" is kept for portability across 1-TC parts.
            dimension_semantics=("parallel", "arbitrary"),
            vmem_limit_bytes=vmem_limit),
    )(x_flat, w1_t, w2_t)

    return out.reshape(B, C, 1, 1)


if __name__ == "__main__":
    # Small shapes consistent with the module: channel=16, ratio=4 -> hidden=4
    B, C, H, W = 2, 16, 16, 16
    ratio = 4
    Cr = C // ratio

    key = jax.random.PRNGKey(0)
    kx, k1, k2 = jax.random.split(key, 3)

    x = jax.random.normal(kx, (B, C, H, W), dtype=jnp.float32)
    # Deterministic synthetic weights (Conv2d weight shapes, bias=False)
    w1 = jax.random.normal(k1, (Cr, C, 1, 1), dtype=jnp.float32) * 0.1
    w2 = jax.random.normal(k2, (C, Cr, 1, 1), dtype=jnp.float32) * 0.1

    out = channel_attention(x, w1, w2)
    out = jax.block_until_ready(out)

    # Pure-JAX reference (same math, no Pallas)
    avg = jnp.mean(x, axis=(2, 3))
    mx = jnp.max(x, axis=(2, 3))
    w1m = w1.reshape(Cr, C)
    w2m = w2.reshape(C, Cr)

    def mlp(p):
        return jnp.maximum(p @ w1m.T, 0.0) @ w2m.T

    ref = jax.nn.sigmoid(mlp(avg) + mlp(mx)).reshape(B, C, 1, 1)
    assert out.shape == (B, C, 1, 1)
    assert jnp.allclose(out, ref, atol=1e-5, rtol=1e-5)

    print("KERNEL_OK")
</pallas_src>

<mosaic_0001>
module attributes {stable_mosaic.version = 11 : i64} {
  func.func @kernel(%arg0: i32, %arg1: i32, %arg2: memref<1x16x256xf32, #tpu.memory_space<vmem>>, %arg3: memref<16x4xf32, #tpu.memory_space<vmem>>, %arg4: memref<4x16xf32, #tpu.memory_space<vmem>>, %arg5: memref<1x1x16xf32, #tpu.memory_space<vmem>>, %arg6: memref<1x16xf32, #tpu.memory_space<vmem>>, %arg7: memref<1x16xf32, #tpu.memory_space<vmem>>) attributes {dimension_semantics = [#tpu.dimension_semantics<parallel>, #tpu.dimension_semantics<arbitrary>], iteration_bounds = array<i64: 2, 1>, scalar_prefetch = 0 : i64, scratch_operands = 2 : i64, tpu.core_type = #tpu.core_type<tc>, window_params = [{transform_indices = @transform_0, window_bounds = array<i64: 1, 16, 256>}, {pipeline_mode = #tpu.pipeline_mode<synchronous>, transform_indices = @transform_1, window_bounds = array<i64: 16, 4>}, {pipeline_mode = #tpu.pipeline_mode<synchronous>, transform_indices = @transform_2, window_bounds = array<i64: 4, 16>}, {transform_indices = @transform_3, window_bounds = array<i64: 1, 1, 16>}]} {
    %c0_i32 = arith.constant 0 : i32
    %0 = arith.cmpi eq, %arg1, %c0_i32 : i32
    %1 = arith.extui %0 : i1 to i32
    %c0_i32_0 = arith.constant 0 : i32
    %2 = arith.cmpi ne, %1, %c0_i32_0 : i32
    scf.if %2 {
      %cst_14 = arith.constant 0.000000e+00 : f32
      %15 = vector.broadcast %cst_14 : f32 to vector<1x16xf32>
      %c0_15 = arith.constant 0 : index
      %c0_16 = arith.constant 0 : index
      %16 = vector.load %arg6[%c0_15, %c0_16] : memref<1x16xf32, #tpu.memory_space<vmem>>, vector<1x16xf32>
      tpu.vector_store %arg6[%c0_15, %c0_16], %15 {strides = array<i32>} : memref<1x16xf32, #tpu.memory_space<vmem>>, vector<1x16xf32>,
      %cst_17 = arith.constant 0xFF800000 : f32
      %17 = vector.broadcast %cst_17 : f32 to vector<1x16xf32>
      %c0_18 = arith.constant 0 : index
      %c0_19 = arith.constant 0 : index
      %18 = vector.load %arg7[%c0_18, %c0_19] : memref<1x16xf32, #tpu.memory_space<vmem>>, vector<1x16xf32>
      tpu.vector_store %arg7[%c0_18, %c0_19], %17 {strides = array<i32>} : memref<1x16xf32, #tpu.memory_space<vmem>>, vector<1x16xf32>,
    } else {
    }
    %c0 = arith.constant 0 : index
    %c0_1 = arith.constant 0 : index
    %c0_2 = arith.constant 0 : index
    %3 = vector.load %arg2[%c0, %c0_1, %c0_2] : memref<1x16x256xf32, #tpu.memory_space<vmem>>, vector<1x16x256xf32>
    %c0_3 = arith.constant 0 : index
    %c0_4 = arith.constant 0 : index
    %4 = vector.load %arg6[%c0_3, %c0_4] : memref<1x16xf32, #tpu.memory_space<vmem>>, vector<1x16xf32>
    %cst = arith.constant dense<0.000000e+00> : vector<1x16xf32>
    %5 = vector.multi_reduction <add>, %3, %cst [2] : vector<1x16x256xf32> to vector<1x16xf32>
    %6 = arith.addf %4, %5 : vector<1x16xf32>
    %c0_5 = arith.constant 0 : index
    %c0_6 = arith.constant 0 : index
    %7 = vector.load %arg6[%c0_5, %c0_6] : memref<1x16xf32, #tpu.memory_space<vmem>>, vector<1x16xf32>
    tpu.vector_store %arg6[%c0_5, %c0_6], %6 {strides = array<i32>} : memref<1x16xf32, #tpu.memory_space<vmem>>, vector<1x16xf32>,
    %c0_7 = arith.constant 0 : index
    %c0_8 = arith.constant 0 : index
    %8 = vector.load %arg7[%c0_7, %c0_8] : memref<1x16xf32, #tpu.memory_space<vmem>>, vector<1x16xf32>
    %cst_9 = arith.constant dense<0xFF800000> : vector<1x16xf32>
    %9 = vector.multi_reduction <maximumf>, %3, %cst_9 [2] : vector<1x16x256xf32> to vector<1x16xf32>
    %10 = arith.maximumf %8, %9 : vector<1x16xf32>
    %c0_10 = arith.constant 0 : index
    %c0_11 = arith.constant 0 : index
    %11 = vector.load %arg7[%c0_10, %c0_11] : memref<1x16xf32, #tpu.memory_space<vmem>>, vector<1x16xf32>
    tpu.vector_store %arg7[%c0_10, %c0_11], %10 {strides = array<i32>} : memref<1x16xf32, #tpu.memory_space<vmem>>, vector<1x16xf32>,
    %c0_i32_12 = arith.constant 0 : i32
    %12 = arith.cmpi eq, %arg1, %c0_i32_12 : i32
    %13 = arith.extui %12 : i1 to i32
    %c0_i32_13 = arith.constant 0 : i32
    %14 = arith.cmpi ne, %13, %c0_i32_13 : i32
    scf.if %14 {
      %c0_14 = arith.constant 0 : index
      %c0_15 = arith.constant 0 : index
      %15 = vector.load %arg6[%c0_14, %c0_15] : memref<1x16xf32, #tpu.memory_space<vmem>>, vector<1x16xf32>
      %cst_16 = arith.constant 3.906250e-03 : f32
      %16 = vector.broadcast %cst_16 : f32 to vector<1x16xf32>
      %17 = arith.mulf %15, %16 : vector<1x16xf32>
      %c0_17 = arith.constant 0 : index
      %c0_18 = arith.constant 0 : index
      %18 = vector.load %arg7[%c0_17, %c0_18] : memref<1x16xf32, #tpu.memory_space<vmem>>, vector<1x16xf32>
      %c0_19 = arith.constant 0 : index
      %c0_20 = arith.constant 0 : index
      %19 = vector.load %arg3[%c0_19, %c0_20] : memref<16x4xf32, #tpu.memory_space<vmem>>, vector<16x4xf32>
      %c0_21 = arith.constant 0 : index
      %c0_22 = arith.constant 0 : index
      %20 = vector.load %arg4[%c0_21, %c0_22] : memref<4x16xf32, #tpu.memory_space<vmem>>, vector<4x16xf32>
      %cst_23 = arith.constant dense<0.000000e+00> : vector<1x4xf32>
      %21 = tpu.matmul %17, %19, %cst_23 {dimension_numbers = #tpu.dot_dimension_numbers<[1], [0], [0], [1], [0, 0, 1, 1], [], []>} : vector<1x16xf32>, vector<16x4xf32>, vector<1x4xf32> -> vector<1x4xf32>
      %cst_24 = arith.constant 0.000000e+00 : f32
      %22 = vector.broadcast %cst_24 : f32 to vector<1x4xf32>
      %23 = arith.maximumf %21, %22 : vector<1x4xf32>
      %cst_25 = arith.constant dense<0.000000e+00> : vector<1x16xf32>
      %24 = tpu.matmul %23, %20, %cst_25 {dimension_numbers = #tpu.dot_dimension_numbers<[1], [0], [0], [1], [0, 0, 1, 1], [], []>} : vector<1x4xf32>, vector<4x16xf32>, vector<1x16xf32> -> vector<1x16xf32>
      %cst_26 = arith.constant dense<0.000000e+00> : vector<1x4xf32>
      %25 = tpu.matmul %18, %19, %cst_26 {dimension_numbers = #tpu.dot_dimension_numbers<[1], [0], [0], [1], [0, 0, 1, 1], [], []>} : vector<1x16xf32>, vector<16x4xf32>, vector<1x4xf32> -> vector<1x4xf32>
      %cst_27 = arith.constant 0.000000e+00 : f32
      %26 = vector.broadcast %cst_27 : f32 to vector<1x4xf32>
      %27 = arith.maximumf %25, %26 : vector<1x4xf32>
      %cst_28 = arith.constant dense<0.000000e+00> : vector<1x16xf32>
      %28 = tpu.matmul %27, %20, %cst_28 {dimension_numbers = #tpu.dot_dimension_numbers<[1], [0], [0], [1], [0, 0, 1, 1], [], []>} : vector<1x4xf32>, vector<4x16xf32>, vector<1x16xf32> -> vector<1x16xf32>
      %29 = arith.addf %24, %28 : vector<1x16xf32>
      %30 = arith.negf %29 : vector<1x16xf32>
      %31 = math.exp %30 : vector<1x16xf32>
      %cst_29 = arith.constant 1.000000e+00 : f32
      %32 = vector.broadcast %cst_29 : f32 to vector<1x16xf32>
      %33 = arith.addf %32, %31 : vector<1x16xf32>
      %34 = arith.divf %32, %33 : vector<1x16xf32>
      %35 = vector.shape_cast %34 : vector<1x16xf32> to vector<1x1x16xf32>
      %c0_30 = arith.constant 0 : index
      %c0_31 = arith.constant 0 : index
      %c0_32 = arith.constant 0 : index
      %36 = vector.load %arg5[%c0_30, %c0_31, %c0_32] : memref<1x1x16xf32, #tpu.memory_space<vmem>>, vector<1x1x16xf32>
      tpu.vector_store %arg5[%c0_30, %c0_31, %c0_32], %35 {strides = array<i32>} : memref<1x1x16xf32, #tpu.memory_space<vmem>>, vector<1x1x16xf32>,
    } else {
    }
    return
  }
  func.func @transform_0(%arg0: i32, %arg1: i32) -> (i32, i32, i32) {
    %c0_i32 = arith.constant 0 : i32
    %c0_i32_0 = arith.constant 0 : i32
    return %arg0, %c0_i32, %arg1 : i32, i32, i32
  }
  func.func @transform_1(%arg0: i32, %arg1: i32) -> (i32, i32) {
    %c0_i32 = arith.constant 0 : i32
    %c0_i32_0 = arith.constant 0 : i32
    %c0_i32_1 = arith.constant 0 : i32
    return %c0_i32, %c0_i32_0 : i32, i32
  }
  func.func @transform_2(%arg0: i32, %arg1: i32) -> (i32, i32) {
    %c0_i32 = arith.constant 0 : i32
    %c0_i32_0 = arith.constant 0 : i32
    %c0_i32_1 = arith.constant 0 : i32
    return %c0_i32, %c0_i32_0 : i32, i32
  }
  func.func @transform_3(%arg0: i32, %arg1: i32) -> (i32, i32, i32) {
    %c0_i32 = arith.constant 0 : i32
    %c0_i32_0 = arith.constant 0 : i32
    %c0_i32_1 = arith.constant 0 : i32
    return %arg0, %c0_i32, %c0_i32_0 : i32, i32, i32
  }
}

</mosaic_0001>

<llo_original>
// kernel: tpu_custom_call.1
$region0: #{tpu_custom_call.1}
  #allocation0 [shape = 'u32[]', space=smem, size = 0x4, offset = 0x4, fixed_abs, tag = 'smem constant byte address 0x4 - core index']
  #allocation1 [shape = 'u32[72,128]{1,0:T(1,128)}', space=vmem, size = 0x9000, scoped, tag = 'internal scratch']
  #allocation2 [shape = 'f32[1,16]{1,0:T(1,128)}', space=vmem, size = 0x200, scoped, tag = 'scratch operand']
  #allocation3 [shape = 'f32[1,16]{1,0:T(1,128)}', space=vmem, size = 0x200, scoped, tag = 'scratch operand']
  %s0 = inlined_call_operand.hbm [shape: f32[2,16,256], index: 0, kind: input, shape index: {}]
  %s1 = inlined_call_operand.vmem [shape: f32[16,4], index: 1, kind: input, shape index: {}]
  %s2 = inlined_call_operand.vmem [shape: f32[4,16], index: 2, kind: input, shape index: {}]
  %s3 = inlined_call_operand.hbm [shape: f32[2,1,16], index: 3, kind: output, shape index: {}]
  %s4 = sld [smem:[#allocation0]]
  $region57: #{tpu_custom_call.1} parent=0
    _
  %s6 = ssub.s32 1, %s4
  %s7 = scalar_select 0, %s6, %s4
  $region1: #{tpu_custom_call.1} parent=0
    #allocation4 [shape = 'u8[32768]{0}', space=vmem, size = 0x8000, scoped, tag = 'input window, operand 0']
    #allocation5 [shape = 's32[2]{0}', space=sflag, size = 0x8, scoped, tag = 'scoped memory for tpu_custom_call.1']
    #allocation6 [shape = 's32[2]{0}', space=sflag, size = 0x8, scoped, tag = 'scoped memory for tpu_custom_call.1']
    #allocation7 [shape = 'u8[1024]{0}', space=vmem, size = 0x400, scoped, tag = 'output window, operand 0']
    %8 = vsyncpa [#allocation5], 0
    %s9 = scalar_lea.sflag [#allocation5], 1
    %10 = vsyncpa %s9, 0
    %11 = vsyncpa [#allocation6], 0
    %s12 = scalar_lea.sflag [#allocation6], 1
    %13 = vsyncpa %s12, 0
    loop: start=0, step=1, limit=4
    $region2: #{tpu_custom_call.1} parent=1 // loop_pre_header
      _
    $region3: #{tpu_custom_call.1} parent=1 // loop_header
      %s15 = sphi 0, %s19
      %p16 = scmp.ge.s32.totalorder %s15, 4
      %s22 = sphi 0, %s34
      %s23 = sphi 0, %s30
      %s24 = sphi 0, %s22
      %s25 = sphi 0, %s23
      %s26 = sphi 0, %s24
      %s27 = sphi 0, %s25
      %s39 = sphi 0, %s41
      %s42 = sphi 0, %s39
      %s43 = sphi 0, %s42
      %s59 = sphi 0, %s43
      %s63 = sphi 0, %s63
      %s65 = sphi 0, %s63
      %s66 = sphi 0, %s65
      %s80 = sphi 0, %s66
      %s84 = sphi 0, %s84
      %s86 = sphi 0, %s84
      %s87 = sphi 0, %s86
      %s101 = sphi 0, %s87
      %s107 = sphi 0, %s109
      %s110 = sphi 0, %s107
      %s111 = sphi 0, %s110
      %s127 = sphi 0, %s111
    $region4: #{tpu_custom_call.1} parent=1 // loop_header_branch
      %18 = sbr.rel (%p16) target = $region8
    $region5: #{tpu_custom_call.1} parent=1 // loop_body
      %s20 = ssub.s32 %s15, 1
      %s21 = ssub.s32 %s15, 2
      %s28 = sadd.s32 1, %s23
      %p29 = scmp.ge.s32.totalorder %s28, 1
      %s30 = scalar_select %p29, 0, %s28
      %s31 = sadd.s32 1, %s22
      %s32 = scalar_select %p29, %s31, %s22
      %p33 = scmp.ge.s32.totalorder %s32, 2
      %s34 = scalar_select %p33, 0, %s32
      %s35 = ssub.s32 %s22, %s34
      %s36 = ssub.s32 %s23, %s30
      %s37 = sor.u32 %s35, %s36
      %p38 = scmp.eq.s32.totalorder %s37, 0
      %s40 = sadd.s32 %s39, 1
      %s41 = scalar_select %p38, %s39, %s40
      %p44 = pneg %p38
      %p45 = scmp.eq.s32.totalorder %s15, 1
      %p46 = por %p44, %p45
      %p47 = scmp.ne.s32.totalorder %s39, %s42
      %p48 = scmp.eq.s32.totalorder %s15, 0
      %p49 = por %p47, %p48
      %p50 = scmp.ne.s32.totalorder %s39, %s42
      %p51 = scmp.eq.s32.totalorder %s20, 1
      %p52 = por %p50, %p51
      %p53 = scmp.ne.s32.totalorder %s42, %s43
      %p54 = scmp.eq.s32.totalorder %s20, 0
      %p55 = por %p53, %p54
      %p56 = scmp.ne.s32.totalorder %s42, %s43
      %p57 = scmp.eq.s32.totalorder %s21, 1
      %p58 = por %p56, %p57
      %p60 = scmp.ne.s32.totalorder %s43, %s59
      %p61 = scmp.eq.s32.totalorder %s21, 0
      %p62 = por %p60, %p61
      %s64 = sadd.s32 %s63, 1
      %p67 = scmp.eq.s32.totalorder %s15, 1
      %p68 = scmp.ne.s32.totalorder %s63, %s65
      %p69 = scmp.eq.s32.totalorder %s15, 0
      %p70 = por %p68, %p69
      %p71 = scmp.ne.s32.totalorder %s63, %s65
      %p72 = scmp.eq.s32.totalorder %s20, 1
      %p73 = por %p71, %p72
      %p74 = scmp.ne.s32.totalorder %s65, %s66
      %p75 = scmp.eq.s32.totalorder %s20, 0
      %p76 = por %p74, %p75
      %p77 = scmp.ne.s32.totalorder %s65, %s66
      %p78 = scmp.eq.s32.totalorder %s21, 1
      %p79 = por %p77, %p78
      %p81 = scmp.ne.s32.totalorder %s66, %s80
      %p82 = scmp.eq.s32.totalorder %s21, 0
      %p83 = por %p81, %p82
      %s85 = sadd.s32 %s84, 1
      %p88 = scmp.eq.s32.totalorder %s15, 1
      %p89 = scmp.ne.s32.totalorder %s84, %s86
      %p90 = scmp.eq.s32.totalorder %s15, 0
      %p91 = por %p89, %p90
      %p92 = scmp.ne.s32.totalorder %s84, %s86
      %p93 = scmp.eq.s32.totalorder %s20, 1
      %p94 = por %p92, %p93
      %p95 = scmp.ne.s32.totalorder %s86, %s87
      %p96 = scmp.eq.s32.totalorder %s20, 0
      %p97 = por %p95, %p96
      %p98 = scmp.ne.s32.totalorder %s86, %s87
      %p99 = scmp.eq.s32.totalorder %s21, 1
      %p100 = por %p98, %p99
      %p102 = scmp.ne.s32.totalorder %s87, %s101
      %p103 = scmp.eq.s32.totalorder %s21, 0
      %p104 = por %p102, %p103
      %s105 = ssub.s32 %s22, %s34
      %p106 = scmp.eq.s32.totalorder %s105, 0
      %s108 = sadd.s32 %s107, 1
      %s109 = scalar_select %p106, %s107, %s108
      %p112 = pneg %p106
      %p113 = scmp.eq.s32.totalorder %s15, 1
      %p114 = por %p112, %p113
      %p115 = scmp.ne.s32.totalorder %s107, %s110
      %p116 = scmp.eq.s32.totalorder %s15, 0
      %p117 = por %p115, %p116
      %p118 = scmp.ne.s32.totalorder %s107, %s110
      %p119 = scmp.eq.s32.totalorder %s20, 1
      %p120 = por %p118, %p119
      %p121 = scmp.ne.s32.totalorder %s110, %s111
      %p122 = scmp.eq.s32.totalorder %s20, 0
      %p123 = por %p121, %p122
      %p124 = scmp.ne.s32.totalorder %s110, %s111
      %p125 = scmp.eq.s32.totalorder %s21, 1
      %p126 = por %p124, %p125
      %p128 = scmp.ne.s32.totalorder %s111, %s127
      %p129 = scmp.eq.s32.totalorder %s21, 0
      %p130 = por %p128, %p129
      %p131 = scmp.le.s32.totalorder 1, %s15
      %p132 = scmp.lt.s32.totalorder %s15, 3
      %p133 = pnand %p131, %p132
      %p134 = pneg %p133
      // Predicated region
      $region9: #{tpu_custom_call.1} parent=5 // pred_check
        _
      $region10: #{tpu_custom_call.1} parent=5 // pred_check_branch
        %136 = sbr.rel (%p133) target = $region12
      $region11: #{tpu_custom_call.1} parent=5 // pred_region
        %s137 = ssub.s32 %s15, 1
        // Predicated region
        $region13: #{tpu_custom_call.1} parent=11 // pred_check
          %p138 = pneg %p76
        $region14: #{tpu_custom_call.1} parent=11 // pred_check_branch
          %140 = sbr.rel (%p138) target = $region16
        $region15: #{tpu_custom_call.1} parent=11 // pred_region
          _
        $region16: #{tpu_custom_call.1} parent=11 // pred_fallthru
          _
        // Predicated region
        $region17: #{tpu_custom_call.1} parent=11 // pred_check
          %p141 = pneg %p97
        $region18: #{tpu_custom_call.1} parent=11 // pred_check_branch
          %143 = sbr.rel (%p141) target = $region20
        $region19: #{tpu_custom_call.1} parent=11 // pred_region
          _
        $region20: #{tpu_custom_call.1} parent=11 // pred_fallthru
          _
      $region12: #{tpu_custom_call.1} parent=5 // pred_fallthru
        _
      %p144 = scmp.lt.s32.totalorder %s15, 2
      // Predicated region
      $region21: #{tpu_custom_call.1} parent=5 // pred_check
        %p145 = pneg %p144
      $region22: #{tpu_custom_call.1} parent=5 // pred_check_branch
        %147 = sbr.rel (%p145) target = $region24
      $region23: #{tpu_custom_call.1} parent=5 // pred_region
        // Predicated region
        $region25: #{tpu_custom_call.1} parent=23 // pred_check
          %p148 = pneg %p49
        $region26: #{tpu_custom_call.1} parent=23 // pred_check_branch
          %150 = sbr.rel (%p148) target = $region28
        $region27: #{tpu_custom_call.1} parent=23 // pred_region
          %s151 = sand.u32 %s39, 1
          %s152 = scalar_lea.sflag [#allocation5], %s151
          %s153 = sand.u32 %s39, 1
          %s154 = smul.addr %s153, 32
          %s155 = scalar_lea.vmem [#allocation4], %s154
          %s156 = smul.u32 2, %s23
          %158 = vsyncadd %s152, 0
          %s159 = smul.addr %s22, 4
          %s160 = sadd.s32 %s156, %s159
          %s161 = smul.addr %s160, 8
          %s162 = scalar_lea.hbm %s0, %s161
          %s163 = sshll.u32 %s162, 4
          %s164 = int_to_ptr.hbm [resolvable:$true] %s163
          %s165 = sshll.u32 %s155, 4
          %s166 = int_to_ptr.vmem [resolvable:$true] %s165
          %171 = dma.hbm_to_vmem [thread:$0]  %s164, 512, %s166, %s152, 256, 256, 16
        $region28: #{tpu_custom_call.1} parent=23 // pred_fallthru
          _
      $region24: #{tpu_custom_call.1} parent=5 // pred_fallthru
        _
      %p172 = scmp.le.s32.totalorder 1, %s15
      %p173 = scmp.lt.s32.totalorder %s15, 3
      %p174 = pnand %p172, %p173
      %p175 = pneg %p174
      // Predicated region
      $region29: #{tpu_custom_call.1} parent=5 // pred_check
        _
      $region30: #{tpu_custom_call.1} parent=5 // pred_check_branch
        %177 = sbr.rel (%p174) target = $region32
      $region31: #{tpu_custom_call.1} parent=5 // pred_region
        %s178 = ssub.s32 %s15, 1
        %s179 = sand.u32 %s42, 1
        %s180 = scalar_lea.sflag [#allocation5], %s179
        %s181 = sand.u32 %s42, 1
        %s182 = smul.addr %s181, 32
        %s183 = scalar_lea.vmem [#allocation4], %s182
        // Predicated region
        $region33: #{tpu_custom_call.1} parent=31 // pred_check
          %p184 = pneg %p55
        $region34: #{tpu_custom_call.1} parent=31 // pred_check_branch
          %186 = sbr.rel (%p184) target = $region36
        $region35: #{tpu_custom_call.1} parent=31 // pred_region
          %188 = dma.done %s180, 512
        $region36: #{tpu_custom_call.1} parent=31 // pred_fallthru
          _
        %s189 = sand.u32 %s42, 1
        %s190 = scalar_lea.sflag [#allocation5], %s189
        %s191 = sand.u32 %s42, 1
        %s192 = smul.addr %s191, 32
        %s193 = scalar_lea.vmem [#allocation4], %s192
        %p194 = pneg %p55
        %p195 = pneg %p52
        %p196 = pneg %p76
        %p197 = pneg %p73
        %p198 = pneg %p97
        %p199 = pneg %p94
        %p200 = pneg %p123
        %p201 = pneg %p120
        %s202 = sand.u32 %s110, 1
        %s203 = scalar_lea.sflag [#allocation6], %s202
        %s204 = sand.u32 %s110, 1
        %s205 = scalar_lea.vmem [#allocation7], %s204
        %s206 = smul.u32 2, %s25
        %p207 = scmp.eq.s32.totalorder %s25, 0
        // Predicated region
        $region37: #{tpu_custom_call.1} parent=31 // pred_check
          %p208 = pneg %p207
        $region38: #{tpu_custom_call.1} parent=31 // pred_check_branch
          %210 = sbr.rel (%p208) target = $region40
        $region39: #{tpu_custom_call.1} parent=31 // pred_region
          %vm211 = vcmask 122880
          %212 = vst.msk [vmem:[#allocation2] sm:$0x1] %vm211, 0.0
          %213 = vst.msk [vmem:[#allocation3] sm:$0x1] %vm211, -inf
        $region40: #{tpu_custom_call.1} parent=31 // pred_fallthru
          _
        %v214 = vld [vmem:[%s183] sm:$0xff]
        %v215 = vld [vmem:[%s183 + $0x8] sm:$0xff]
        %v216 = vld [vmem:[%s183 + $0x10] sm:$0xff]
        %v217 = vld [vmem:[%s183 + $0x18] sm:$0xff]
        %v218 = vld [vmem:[#allocation2] sm:$0x1]
        %v219 = vadd.f32 %v214, %v215
        %220 = vadd.xlane.f32.xlu0 %v219
        %v221 = vpop.xlane.xlu0 %220
        %v222 = vadd.f32 %v216, %v217
        %223 = vadd.xlane.f32.xlu0 %v222
        %v224 = vpop.xlane.xlu0 %223
        %v227 = vperm.slane %v221, 0
        %v228 = vperm.slane %v221, 1
        %v229 = vperm.slane %v221, 2
        %v230 = vperm.slane %v221, 3
        %v231 = vperm.slane %v221, 4
        %v232 = vperm.slane %v221, 5
        %v233 = vperm.slane %v221, 6
        %v234 = vperm.slane %v221, 7
        %v235 = vperm.slane %v224, 0
        %v236 = vperm.slane %v224, 1
        %v237 = vperm.slane %v224, 2
        %v238 = vperm.slane %v224, 3
        %v239 = vperm.slane %v224, 4
        %v240 = vperm.slane %v224, 5
        %v241 = vperm.slane %v224, 6
        %v242 = vperm.slane %v224, 7
        %243 = vst [vmem:[#allocation1] ss:$9 sm:$0xff] %v227
        %s244 = scalar_lea.vmem [#allocation1], 1
        %245 = vst [vmem:[%s244] ss:$9 sm:$0xff] %v228
        %s246 = scalar_lea.vmem [#allocation1], 2
        %247 = vst [vmem:[%s246] ss:$9 sm:$0xff] %v229
        %s248 = scalar_lea.vmem [#allocation1], 3
        %249 = vst [vmem:[%s248] ss:$9 sm:$0xff] %v230
        %s250 = scalar_lea.vmem [#allocation1], 4
        %251 = vst [vmem:[%s250] ss:$9 sm:$0xff] %v231
        %s252 = scalar_lea.vmem [#allocation1], 5
        %253 = vst [vmem:[%s252] ss:$9 sm:$0xff] %v232
        %s254 = scalar_lea.vmem [#allocation1], 6
        %255 = vst [vmem:[%s254] ss:$9 sm:$0xff] %v233
        %s256 = scalar_lea.vmem [#allocation1], 7
        %257 = vst [vmem:[%s256] ss:$9 sm:$0xff] %v234
        %v258 = vld [vmem:[#allocation1] sm:$0xff]
        %259 = vst [vmem:[#allocation1] ss:$9 sm:$0xff] %v235
        %260 = vst [vmem:[%s244] ss:$9 sm:$0xff] %v236
        %261 = vst [vmem:[%s246] ss:$9 sm:$0xff] %v237
        %262 = vst [vmem:[%s248] ss:$9 sm:$0xff] %v238
        %263 = vst [vmem:[%s250] ss:$9 sm:$0xff] %v239
        %264 = vst [vmem:[%s252] ss:$9 sm:$0xff] %v240
        %265 = vst [vmem:[%s254] ss:$9 sm:$0xff] %v241
        %266 = vst [vmem:[%s256] ss:$9 sm:$0xff] %v242
        %v267 = vld [vmem:[#allocation1] sm:$0xff]
        %268 = vset.pattern.permute.xlu0 0
        %269 = vperm.xlu0 %268, %v258
        %v270 = vpop.permute.xlu0 %269
        %271 = vset.pattern.permute.xlu0 0
        %272 = vperm.xlu0 %271, %v267
        %v273 = vpop.permute.xlu0 %272
        %v274 = vlaneseq
        %v275 = vand.u32 %v274, 127
        %v276 = vperm.slane %v270, %v275
        %v277 = vadd.s32 %v275, 4294967288
        %v278 = vperm.slane %v273, %v277
        %vm279 = vcmask 130112
        %v280 = vsel %vm279, %v278, %v276
        %v282 = vadd.f32 %v218, %v280
        %vm283 = vcmask 122880
        %284 = vst.msk [vmem:[#allocation2] sm:$0x1] %vm283, %v282
        %v285 = vld [vmem:[#allocation3] sm:$0x1]
        %v286 = vmax.f32 %v214, %v215
        %287 = vmax.xlane.f32.xlu0 %v286
        %v288 = vpop.xlane.xlu0 %287
        %v289 = vmax.f32 %v216, %v217
        %290 = vmax.xlane.f32.xlu0 %v289
        %v291 = vpop.xlane.xlu0 %290
        %v294 = vperm.slane %v288, 0
        %v295 = vperm.slane %v288, 1
        %v296 = vperm.slane %v288, 2
        %v297 = vperm.slane %v288, 3
        %v298 = vperm.slane %v288, 4
        %v299 = vperm.slane %v288, 5
        %v300 = vperm.slane %v288, 6
        %v301 = vperm.slane %v288, 7
        %v302 = vperm.slane %v291, 0
        %v303 = vperm.slane %v291, 1
        %v304 = vperm.slane %v291, 2
        %v305 = vperm.slane %v291, 3
        %v306 = vperm.slane %v291, 4
        %v307 = vperm.slane %v291, 5
        %v308 = vperm.slane %v291, 6
        %v309 = vperm.slane %v291, 7
        %310 = vst [vmem:[#allocation1] ss:$9 sm:$0xff] %v294
        %s311 = scalar_lea.vmem [#allocation1], 1
        %312 = vst [vmem:[%s311] ss:$9 sm:$0xff] %v295
        %s313 = scalar_lea.vmem [#allocation1], 2
        %314 = vst [vmem:[%s313] ss:$9 sm:$0xff] %v296
        %s315 = scalar_lea.vmem [#allocation1], 3
        %316 = vst [vmem:[%s315] ss:$9 sm:$0xff] %v297
        %s317 = scalar_lea.vmem [#allocation1], 4
        %318 = vst [vmem:[%s317] ss:$9 sm:$0xff] %v298
        %s319 = scalar_lea.vmem [#allocation1], 5
        %320 = vst [vmem:[%s319] ss:$9 sm:$0xff] %v299
        %s321 = scalar_lea.vmem [#allocation1], 6
        %322 = vst [vmem:[%s321] ss:$9 sm:$0xff] %v300
        %s323 = scalar_lea.vmem [#allocation1], 7
        %324 = vst [vmem:[%s323] ss:$9 sm:$0xff] %v301
        %v325 = vld [vmem:[#allocation1] sm:$0xff]
        %326 = vst [vmem:[#allocation1] ss:$9 sm:$0xff] %v302
        %327 = vst [vmem:[%s311] ss:$9 sm:$0xff] %v303
        %328 = vst [vmem:[%s313] ss:$9 sm:$0xff] %v304
        %329 = vst [vmem:[%s315] ss:$9 sm:$0xff] %v305
        %330 = vst [vmem:[%s317] ss:$9 sm:$0xff] %v306
        %331 = vst [vmem:[%s319] ss:$9 sm:$0xff] %v307
        %332 = vst [vmem:[%s321] ss:$9 sm:$0xff] %v308
        %333 = vst [vmem:[%s323] ss:$9 sm:$0xff] %v309
        %v334 = vld [vmem:[#allocation1] sm:$0xff]
        %335 = vset.pattern.permute.xlu0 0
        %336 = vperm.xlu0 %335, %v325
        %v337 = vpop.permute.xlu0 %336
        %338 = vset.pattern.permute.xlu0 0
        %339 = vperm.xlu0 %338, %v334
        %v340 = vpop.permute.xlu0 %339
        %v341 = vperm.slane %v337, %v275
        %v342 = vperm.slane %v340, %v277
        %v343 = vsel %vm279, %v342, %v341
        %v345 = vmax.f32 %v285, %v343
        %346 = vst.msk [vmem:[#allocation3] sm:$0x1] %vm283, %v345
        // Predicated region
        $region41: #{tpu_custom_call.1} parent=31 // pred_check
          %p347 = pneg %p207
        $region42: #{tpu_custom_call.1} parent=31 // pred_check_branch
          %349 = sbr.rel (%p347) target = $region44
        $region43: #{tpu_custom_call.1} parent=31 // pred_region
          %v350 = vld [vmem:[#allocation2] sm:$0x1]
          %v351 = vmul.f32 %v350, 0.00390625
          %v352 = vld [vmem:[#allocation3] sm:$0x1]
          %v353 = vld [vmem:[%s1] sm:$0xff]
          %v354 = vld [vmem:[%s1 + $0x8] sm:$0xff]
          %v355 = vld [vmem:[%s2] sm:$0xf]
          %vm356 = vcmask 130048
          %v358 = vsel %vm356, %v351, 0
          %360 = vmatpush.msra.mxu0 0.0
          %361 = vmatpush.msra.mxu0 0.0
          %362 = vmatpush.msra.mxu0 0.0
          %363 = vmatpush.msra.mxu0 0.0
          %364 = vmatpush.msra.mxu0 0.0
          %365 = vmatpush.msra.mxu0 0.0
          %366 = vmatpush.msra.mxu0 0.0
          %367 = vmatpush.msra.mxu0 0.0
          %368 = vmatpush.msra.mxu0 0.0
          %369 = vmatpush.msra.mxu0 0.0
          %370 = vmatpush.msra.mxu0 0.0
          %371 = vmatpush.msra.mxu0 0.0
          %372 = vmatpush.msra.mxu0 0.0
          %373 = vmatpush.msra.mxu0 0.0
          %374 = vmatpush.msra.mxu0 %v354
          %375 = vmatpush.msra.mxu0 %v353
          %376 = vmatmul.f32.gmra.mxu0 %v358
          %v377 = vpop.f32.mrf.mxu0
          %v378 = vadd.f32 0.0, %v377
          %379 = vdwg.mxu0
          %v380 = vmax.f32 %v378, 0.0
          %v382 = vsel %vm356, %v352, 0
          %384 = vmatpush.msra.mxu0 0.0
          %385 = vmatpush.msra.mxu0 0.0
          %386 = vmatpush.msra.mxu0 0.0
          %387 = vmatpush.msra.mxu0 0.0
          %388 = vmatpush.msra.mxu0 0.0
          %389 = vmatpush.msra.mxu0 0.0
          %390 = vmatpush.msra.mxu0 0.0
          %391 = vmatpush.msra.mxu0 0.0
          %392 = vmatpush.msra.mxu0 0.0
          %393 = vmatpush.msra.mxu0 0.0
          %394 = vmatpush.msra.mxu0 0.0
          %395 = vmatpush.msra.mxu0 0.0
          %396 = vmatpush.msra.mxu0 0.0
          %397 = vmatpush.msra.mxu0 0.0
          %398 = vmatpush.msra.mxu0 %v354
          %399 = vmatpush.msra.mxu0 %v353
          %400 = vmatmul.f32.gmra.mxu0 %v382
          %v401 = vpop.f32.mrf.mxu0
          %v402 = vadd.f32 0.0, %v401
          %403 = vdwg.mxu0
          %v404 = vmax.f32 %v402, 0.0
          %vm405 = vcmask 31744
          %v407 = vsel %vm405, %v404, 0
          %vm409 = vcmask 1043456
          %v411 = vsel %vm409, %v355, 0
          %413 = vmatpush.msra.mxu0 0.0
          %414 = vmatpush.msra.mxu0 0.0
          %415 = vmatpush.msra.mxu0 0.0
          %416 = vmatpush.msra.mxu0 0.0
          %417 = vmatpush.msra.mxu0 0.0
          %418 = vmatpush.msra.mxu0 0.0
          %419 = vmatpush.msra.mxu0 0.0
          %420 = vmatpush.msra.mxu0 0.0
          %421 = vmatpush.msra.mxu0 0.0
          %422 = vmatpush.msra.mxu0 0.0
          %423 = vmatpush.msra.mxu0 0.0
          %424 = vmatpush.msra.mxu0 0.0
          %425 = vmatpush.msra.mxu0 0.0
          %426 = vmatpush.msra.mxu0 0.0
          %427 = vmatpush.msra.mxu0 0.0
          %428 = vmatpush.msra.mxu0 %v411
          %429 = vmatmul.f32.gmra.mxu0 %v407
          %v430 = vpop.f32.mrf.mxu0
          %v431 = vadd.f32 0.0, %v430
          %432 = vdwg.mxu0
          %v434 = vsel %vm405, %v380, 0
          %436 = vmatpush.msra.mxu0 0.0
          %437 = vmatpush.msra.mxu0 0.0
          %438 = vmatpush.msra.mxu0 0.0
          %439 = vmatpush.msra.mxu0 0.0
          %440 = vmatpush.msra.mxu0 0.0
          %441 = vmatpush.msra.mxu0 0.0
          %442 = vmatpush.msra.mxu0 0.0
          %443 = vmatpush.msra.mxu0 0.0
          %444 = vmatpush.msra.mxu0 0.0
          %445 = vmatpush.msra.mxu0 0.0
          %446 = vmatpush.msra.mxu0 0.0
          %447 = vmatpush.msra.mxu0 0.0
          %448 = vmatpush.msra.mxu0 0.0
          %449 = vmatpush.msra.mxu0 0.0
          %450 = vmatpush.msra.mxu0 0.0
          %451 = vmatpush.msra.mxu0 %v411
          %452 = vmatmul.f32.gmra.mxu0 %v434
          %v453 = vpop.f32.mrf.mxu0
          %v454 = vadd.f32 %v431, %v453
          %455 = vdwg.mxu0
          %v456 = vxor.u32 %v454, 2147483648
          %v457 = vmul.f32 %v456, 1.442695
          %v458 = vpow.pop %v457
          %v459 = vadd.f32 %v458, 1.0
          %v460 = vrcp.pop %v459
          %v461 = vmul.f32 %v459, %v460
          %v462 = vsub.f32 1.0, %v461
          %v463 = vmul.f32 %v460, %v462
          %v464 = vadd.f32 %v460, %v463
          %vm465 = vweird.f32 %v459
          %vm466 = vweird.f32 %v460
          %vm467 = vmor %vm465, %vm466
          %v468 = vsel %vm467, %v460, %v464
          %v469 = vand.u32 2147483647, %v459
          %vm470 = vcmp.eq.f32.partialorder %v469, 8.507059e+37
          %v471 = vand.u32 %v459, 2147483648
          %v472 = vor.u32 1.1754944e-38, %v471
          %v473 = vsel %vm470, %v472, %v468
          %v474 = vmul.f32 1.0, %v473
          %475 = vst.msk [vmem:[%s205] sm:$0x1] %vm283, %v474
        $region44: #{tpu_custom_call.1} parent=31 // pred_fallthru
          _
        %s476 = sand.u32 %s110, 1
        %s477 = scalar_lea.sflag [#allocation6], %s476
        %s478 = sand.u32 %s110, 1
        %s479 = scalar_lea.vmem [#allocation7], %s478
        // Predicated region
        $region45: #{tpu_custom_call.1} parent=31 // pred_check
          %p480 = pneg %p120
        $region46: #{tpu_custom_call.1} parent=31 // pred_check_branch
          %482 = sbr.rel (%p480) target = $region48
        $region47: #{tpu_custom_call.1} parent=31 // pred_region
          %484 = vsyncadd %s477, 0
          %s485 = scalar_lea.hbm %s3, %s24
          %s487 = sshll.u32 %s479, 4
          %s488 = int_to_ptr.vmem [resolvable:$true] %s487
          %s489 = sshll.u32 %s485, 4
          %s490 = int_to_ptr.hbm [resolvable:$true] %s489
          %492 = dma.vmem_to_hbm [thread:$0]  %s488, 16, %s490, %s477
        $region48: #{tpu_custom_call.1} parent=31 // pred_fallthru
          _
      $region32: #{tpu_custom_call.1} parent=5 // pred_fallthru
        _
      %p493 = scmp.le.s32.totalorder 2, %s15
      // Predicated region
      $region49: #{tpu_custom_call.1} parent=5 // pred_check
        %p494 = pneg %p493
      $region50: #{tpu_custom_call.1} parent=5 // pred_check_branch
        %496 = sbr.rel (%p494) target = $region52
      $region51: #{tpu_custom_call.1} parent=5 // pred_region
        %s497 = ssub.s32 %s15, 2
        // Predicated region
        $region53: #{tpu_custom_call.1} parent=51 // pred_check
          %p498 = pneg %p126
        $region54: #{tpu_custom_call.1} parent=51 // pred_check_branch
          %500 = sbr.rel (%p498) target = $region56
        $region55: #{tpu_custom_call.1} parent=51 // pred_region
          %s501 = sand.u32 %s111, 1
          %s502 = scalar_lea.sflag [#allocation6], %s501
          %s503 = sand.u32 %s111, 1
          %s504 = scalar_lea.vmem [#allocation7], %s503
          %506 = dma.done %s502, 16
        $region56: #{tpu_custom_call.1} parent=51 // pred_fallthru
          _
      $region52: #{tpu_custom_call.1} parent=5 // pred_fallthru
        _
    $region6: #{tpu_custom_call.1} parent=1 // loop_footer
      %s19 = sadd.s32 1, %s15
    $region7: #{tpu_custom_call.1} parent=1 // loop_footer_branch
      %14 = sbr.rel target = $region3
    $region8: #{tpu_custom_call.1} parent=1 // loop_exit
      _
    %507 = vsyncpa [#allocation5], 1
    %s508 = scalar_lea.sflag [#allocation5], 1
    %509 = vsyncpa %s508, 1
    %510 = vsyncpa [#allocation6], 1
    %s511 = scalar_lea.sflag [#allocation6], 1
    %512 = vsyncpa %s511, 1

</llo_original>
